<compile_context>
chip_gen: v7x
topology: tpu7x:2x2x1
jax: 0.10.0
libtpu: 0.0.40
codegen_flags: <defaults>
</compile_context>

<pallas_src>
import math
import functools

import jax
import jax.numpy as jnp
from jax import lax
from jax.experimental import pallas as pl
from jax.experimental.pallas import tpu as pltpu


# ---------------------------------------------------------------------------
# Kernel 1: fused QKV projection   qkv = x @ Wqkv + bqkv   (full-width MXU)
# ---------------------------------------------------------------------------
def _qkv_proj_kernel(x_ref, w_ref, b_ref, o_ref):
    # x_ref: (TS, E) bf16, w_ref: (E, 3E) bf16, b_ref: (1, 3E) f32
    acc = jnp.dot(x_ref[...], w_ref[...], preferred_element_type=jnp.float32)
    o_ref[...] = (acc + b_ref[...]).astype(o_ref.dtype)


# ---------------------------------------------------------------------------
# Kernel 2: flash-style attention + fused per-head output projection
# grid = (batch, q-tile, head, kv-tile) ; head & kv-tile are reduction axes
# ---------------------------------------------------------------------------
def _attn_kernel(q_ref, k_ref, v_ref, wo_ref, bo_ref, o_ref,
                 acc_ref, m_ref, l_ref, ctx_ref):
    h = pl.program_id(2)
    ki = pl.program_id(3)
    last_h = pl.num_programs(2) - 1
    last_k = pl.num_programs(3) - 1

    @pl.when(jnp.logical_and(h == 0, ki == 0))
    def _():
        acc_ref[...] = jnp.zeros_like(acc_ref)

    @pl.when(ki == 0)
    def _():
        m_ref[...] = jnp.full_like(m_ref, -jnp.inf)
        l_ref[...] = jnp.zeros_like(l_ref)
        ctx_ref[...] = jnp.zeros_like(ctx_ref)

    # scores = q @ k^T  (q is pre-scaled by 1/sqrt(D), folded into Wq/bq).
    s = lax.dot_general(q_ref[...], k_ref[...],
                        (((1,), (1,)), ((), ())),
                        preferred_element_type=jnp.float32)          # (TQ, TK)

    m_prev = m_ref[...]
    m_new = jnp.maximum(m_prev, jnp.max(s, axis=-1, keepdims=True))
    alpha = jnp.exp(m_prev - m_new)
    p = jnp.exp(s - m_new)                                           # unnormalized
    l_ref[...] = alpha * l_ref[...] + jnp.sum(p, axis=-1, keepdims=True)
    ctx_ref[...] = alpha * ctx_ref[...] + jnp.dot(
        p.astype(jnp.bfloat16), v_ref[...], preferred_element_type=jnp.float32)
    m_ref[...] = m_new

    @pl.when(ki == last_k)
    def _():
        # Normalize after the PV matmul, then fold this head's slice of the
        # output projection into the cross-head accumulator.
        ctx_n = ctx_ref[...] * pl.reciprocal(l_ref[...], approx=True)
        acc_ref[...] += jnp.dot(ctx_n.astype(jnp.bfloat16), wo_ref[...],
                                preferred_element_type=jnp.float32)

    @pl.when(jnp.logical_and(h == last_h, ki == last_k))
    def _():
        o_ref[...] = (acc_ref[...] + bo_ref[...]).astype(o_ref.dtype)


# ---------------------------------------------------------------------------
# VMEM-aware tiling helpers
# ---------------------------------------------------------------------------
def _vmem_budget_bytes():
    try:
        cap = pltpu.get_tpu_info().vmem_capacity_bytes
    except Exception:
        cap = 64 * 1024 * 1024          # conservative fallback (v7x physical)
    return (3 * cap) // 4


def _tile_candidates(n, cap):
    c = [t for t in (1024, 512, 256, 128, 64, 32, 16, 8)
         if t <= min(n, cap) and n % t == 0]
    return c if c else [n]


def _choose_qkv_tile(S, E, budget):
    bf, f32 = 2, 4
    for ts in _tile_candidates(S, 1024):
        per_step = (2 * (ts * E * bf + 3 * E * E * bf + 3 * E * f32
                         + ts * 3 * E * bf) + 2 * ts * 3 * E * f32)
        if per_step <= budget:
            return ts
    return _tile_candidates(S, 8)[-1]


def _choose_attn_tiles(S, E, D, budget):
    bf, f32 = 2, 4

    def fits(tq, tk):
        per_step = (2 * (tq * D + 2 * tk * D + D * E) * bf   # q,k,v,wo dbl-buf
                    + 2 * E * f32                            # bo
                    + 2 * tq * E * f32                       # out dbl-buf
                    + tq * (E + D + 256) * f32               # acc/m/l/ctx scratch
                    + 4 * tq * tk * f32)                     # s/p temporaries
        return per_step <= budget

    for tq in _tile_candidates(S, 512):
        for tk in _tile_candidates(S, 1024):
            if fits(tq, tk):
                return tq, tk
    t = _tile_candidates(S, 8)[-1]
    return t, t


# ---------------------------------------------------------------------------
# Wrapper
# ---------------------------------------------------------------------------
def prepare_params(params, *, embed_dim, num_heads):
    """One-time weight prep: fuse QKV, fold 1/sqrt(D) into Wq/bq, per-head Wo."""
    E = embed_dim
    D = E // num_heads
    scale = 1.0 / math.sqrt(D)
    bf16, f32 = jnp.bfloat16, jnp.float32
    wqkv = jnp.concatenate(
        [params["wq_t"] * scale, params["wk_t"], params["wv_t"]], axis=1).astype(bf16)
    bqkv = jnp.concatenate(
        [params["bq"] * scale, params["bk"], params["bv"]], axis=1).astype(f32)
    wo_h = params["wo_t"].reshape(num_heads, D, E).astype(bf16)   # rows grouped by head
    bo = params["bo"].astype(f32)                                 # (1, E)
    return {"wqkv": wqkv, "bqkv": bqkv, "wo_h": wo_h, "bo": bo}


def self_attention_pallas(x, prep, *, num_heads):
    """x: (B, S, E) float32. prep: output of prepare_params."""
    B, S, E = x.shape
    assert E % num_heads == 0
    D = E // num_heads
    bf16 = jnp.bfloat16

    budget = _vmem_budget_bytes()
    x_bf = x.astype(bf16)

    # ---- Kernel 1: fused QKV projection (projected once per row) --------
    TS = _choose_qkv_tile(S, E, budget)
    qkv = pl.pallas_call(
        _qkv_proj_kernel,
        out_shape=jax.ShapeDtypeStruct((B, S, 3 * E), bf16),
        grid_spec=pltpu.PrefetchScalarGridSpec(
            num_scalar_prefetch=0,
            grid=(B, S // TS),
            in_specs=[
                pl.BlockSpec((pl.Squeezed(), TS, E), lambda b, si: (b, si, 0)),
                pl.BlockSpec((E, 3 * E), lambda b, si: (0, 0)),
                pl.BlockSpec((1, 3 * E), lambda b, si: (0, 0)),
            ],
            out_specs=pl.BlockSpec((pl.Squeezed(), TS, 3 * E),
                                   lambda b, si: (b, si, 0)),
        ),
        compiler_params=pltpu.CompilerParams(
            dimension_semantics=("parallel", "parallel"),
            vmem_limit_bytes=budget,
        ),
    )(x_bf, prep["wqkv"], prep["bqkv"])

    # Split into per-head (B, H, S, D) Q/K/V (cheap XLA reshape/transpose in
    # the wrapper, keeps every kernel block last-dim full-width).
    qkv = qkv.reshape(B, S, 3, num_heads, D).transpose(2, 0, 3, 1, 4)
    q, k, v = qkv[0], qkv[1], qkv[2]

    # ---- Kernel 2: flash attention + output projection ------------------
    TQ, TK = _choose_attn_tiles(S, E, D, budget)
    n_qt, n_kt = S // TQ, S // TK

    kv_map = lambda b, qi, h, ki: (b, h, ki, 0)

    out = pl.pallas_call(
        _attn_kernel,
        out_shape=jax.ShapeDtypeStruct((B, S, E), x.dtype),
        grid_spec=pltpu.PrefetchScalarGridSpec(
            num_scalar_prefetch=0,
            grid=(B, n_qt, num_heads, n_kt),
            in_specs=[
                pl.BlockSpec((pl.Squeezed(), pl.Squeezed(), TQ, D),
                             lambda b, qi, h, ki: (b, h, qi, 0)),       # q
                pl.BlockSpec((pl.Squeezed(), pl.Squeezed(), TK, D),
                             kv_map),                                   # k
                pl.BlockSpec((pl.Squeezed(), pl.Squeezed(), TK, D),
                             kv_map),                                   # v
                pl.BlockSpec((pl.Squeezed(), D, E),
                             lambda b, qi, h, ki: (h, 0, 0)),           # Wo head slice
                pl.BlockSpec((1, E), lambda b, qi, h, ki: (0, 0)),      # bo
            ],
            out_specs=pl.BlockSpec((pl.Squeezed(), TQ, E),
                                   lambda b, qi, h, ki: (b, qi, 0)),
            scratch_shapes=[
                pltpu.VMEM((TQ, E), jnp.float32),   # cross-head output accumulator
                pltpu.VMEM((TQ, 1), jnp.float32),   # m (running max)
                pltpu.VMEM((TQ, 1), jnp.float32),   # l (running sum)
                pltpu.VMEM((TQ, D), jnp.float32),   # per-head context accumulator
            ],
        ),
        compiler_params=pltpu.CompilerParams(
            dimension_semantics=("parallel", "parallel", "arbitrary", "arbitrary"),
            vmem_limit_bytes=budget,
        ),
    )(q, k, v, prep["wo_h"], prep["bo"])
    return out


# ---------------------------------------------------------------------------
# Pure-JAX f32 reference (mirrors the PyTorch module exactly)
# ---------------------------------------------------------------------------
def _reference(x, params, *, num_heads):
    B, S, E = x.shape
    D = E // num_heads

    def lin(a, wt, b):
        return a @ wt + b[0]

    q = lin(x, params["wq_t"], params["bq"]).reshape(B, S, num_heads, D).transpose(0, 2, 1, 3)
    k = lin(x, params["wk_t"], params["bk"]).reshape(B, S, num_heads, D).transpose(0, 2, 1, 3)
    v = lin(x, params["wv_t"], params["bv"]).reshape(B, S, num_heads, D).transpose(0, 2, 1, 3)
    scores = jnp.einsum("bhqd,bhkd->bhqk", q, k) / math.sqrt(D)
    attn = jax.nn.softmax(scores, axis=-1)
    out = jnp.einsum("bhqk,bhkd->bhqd", attn, v)
    out = out.transpose(0, 2, 1, 3).reshape(B, S, E)
    return lin(out, params["wo_t"], params["bo"])


def make_params(key, embed_dim):
    """Deterministic nn.Linear-style init: U(-1/sqrt(fan_in), 1/sqrt(fan_in))."""
    bound = 1.0 / math.sqrt(embed_dim)
    keys = jax.random.split(key, 8)

    def w(k):  # stored pre-transposed: (E_in, E_out)
        return jax.random.uniform(k, (embed_dim, embed_dim), jnp.float32, -bound, bound)

    def b(k):
        return jax.random.uniform(k, (1, embed_dim), jnp.float32, -bound, bound)

    return {
        "wq_t": w(keys[0]), "bq": b(keys[1]),
        "wk_t": w(keys[2]), "bk": b(keys[3]),
        "wv_t": w(keys[4]), "bv": b(keys[5]),
        "wo_t": w(keys[6]), "bo": b(keys[7]),
    }


if __name__ == "__main__":
    B, S, E, H = 2, 8, 32, 4   # batch, seq_len, embed_dim, num_heads

    key = jax.random.PRNGKey(0)
    kx, kp = jax.random.split(key)
    x = jax.random.normal(kx, (B, S, E), jnp.float32)
    params = make_params(kp, E)

    prep = prepare_params(params, embed_dim=E, num_heads=H)   # one-time weight prep
    fwd = jax.jit(functools.partial(self_attention_pallas, num_heads=H))
    out = jax.block_until_ready(fwd(x, prep))

    ref = _reference(x, params, num_heads=H)
    assert out.shape == (B, S, E)
    # bf16 MXU operands + approx reciprocal -> loosen tolerance vs f32 reference.
    assert jnp.allclose(out, ref, atol=5e-2, rtol=5e-2), "mismatch vs reference"

    print("KERNEL_OK")
</pallas_src>

<mosaic_0001>
module attributes {stable_mosaic.version = 11 : i64} {
  func.func @_qkv_proj_kernel(%arg0: i32, %arg1: i32, %arg2: memref<1x8x32xbf16, #tpu.memory_space<vmem>>, %arg3: memref<32x96xbf16, #tpu.memory_space<vmem>>, %arg4: memref<1x96xf32, #tpu.memory_space<vmem>>, %arg5: memref<1x8x96xbf16, #tpu.memory_space<vmem>>) attributes {dimension_semantics = [#tpu.dimension_semantics<parallel>, #tpu.dimension_semantics<parallel>], iteration_bounds = array<i64: 2, 1>, scalar_prefetch = 0 : i64, scratch_operands = 0 : i64, tpu.core_type = #tpu.core_type<tc>, window_params = [{transform_indices = @transform_0, window_bounds = array<i64: 1, 8, 32>}, {pipeline_mode = #tpu.pipeline_mode<synchronous>, transform_indices = @transform_1, window_bounds = array<i64: 32, 96>}, {pipeline_mode = #tpu.pipeline_mode<synchronous>, transform_indices = @transform_2, window_bounds = array<i64: 1, 96>}, {transform_indices = @transform_3, window_bounds = array<i64: 1, 8, 96>}]} {
    %c0 = arith.constant 0 : index
    %c0_0 = arith.constant 0 : index
    %c0_1 = arith.constant 0 : index
    %0 = vector.load %arg2[%c0, %c0_0, %c0_1] : memref<1x8x32xbf16, #tpu.memory_space<vmem>>, vector<1x8x32xbf16>
    %1 = vector.shape_cast %0 : vector<1x8x32xbf16> to vector<8x32xbf16>
    %c0_2 = arith.constant 0 : index
    %c0_3 = arith.constant 0 : index
    %2 = vector.load %arg3[%c0_2, %c0_3] : memref<32x96xbf16, #tpu.memory_space<vmem>>, vector<32x96xbf16>
    %cst = arith.constant dense<0.000000e+00> : vector<8x96xf32>
    %3 = tpu.matmul %1, %2, %cst {dimension_numbers = #tpu.dot_dimension_numbers<[1], [0], [0], [1], [0, 0, 1, 1], [], []>} : vector<8x32xbf16>, vector<32x96xbf16>, vector<8x96xf32> -> vector<8x96xf32>
    %c0_4 = arith.constant 0 : index
    %c0_5 = arith.constant 0 : index
    %4 = vector.load %arg4[%c0_4, %c0_5] : memref<1x96xf32, #tpu.memory_space<vmem>>, vector<1x96xf32>
    %5 = vector.broadcast %4 : vector<1x96xf32> to vector<8x96xf32>
    %6 = arith.addf %3, %5 : vector<8x96xf32>
    %7 = arith.truncf %6 : vector<8x96xf32> to vector<8x96xbf16>
    %c0_6 = arith.constant 0 : index
    %c0_7 = arith.constant 0 : index
    %c0_8 = arith.constant 0 : index
    %8 = vector.load %arg5[%c0_6, %c0_7, %c0_8] : memref<1x8x96xbf16, #tpu.memory_space<vmem>>, vector<1x8x96xbf16>
    %9 = vector.shape_cast %8 : vector<1x8x96xbf16> to vector<8x96xbf16>
    %10 = vector.shape_cast %7 : vector<8x96xbf16> to vector<1x8x96xbf16>
    tpu.vector_store %arg5[%c0_6, %c0_7, %c0_8], %10 {strides = array<i32>} : memref<1x8x96xbf16, #tpu.memory_space<vmem>>, vector<1x8x96xbf16>,
    return
  }
  func.func @transform_0(%arg0: i32, %arg1: i32) -> (i32, i32, i32) {
    %c0_i32 = arith.constant 0 : i32
    %c0_i32_0 = arith.constant 0 : i32
    return %arg0, %arg1, %c0_i32 : i32, i32, i32
  }
  func.func @transform_1(%arg0: i32, %arg1: i32) -> (i32, i32) {
    %c0_i32 = arith.constant 0 : i32
    %c0_i32_0 = arith.constant 0 : i32
    %c0_i32_1 = arith.constant 0 : i32
    return %c0_i32, %c0_i32_0 : i32, i32
  }
  func.func @transform_2(%arg0: i32, %arg1: i32) -> (i32, i32) {
    %c0_i32 = arith.constant 0 : i32
    %c0_i32_0 = arith.constant 0 : i32
    %c0_i32_1 = arith.constant 0 : i32
    return %c0_i32, %c0_i32_0 : i32, i32
  }
  func.func @transform_3(%arg0: i32, %arg1: i32) -> (i32, i32, i32) {
    %c0_i32 = arith.constant 0 : i32
    %c0_i32_0 = arith.constant 0 : i32
    return %arg0, %arg1, %c0_i32 : i32, i32, i32
  }
}

module attributes {stable_mosaic.version = 11 : i64} {
  func.func @_attn_kernel(%arg0: i32, %arg1: i32, %arg2: i32, %arg3: i32, %arg4: memref<1x1x8x8xbf16, #tpu.memory_space<vmem>>, %arg5: memref<1x1x8x8xbf16, #tpu.memory_space<vmem>>, %arg6: memref<1x1x8x8xbf16, #tpu.memory_space<vmem>>, %arg7: memref<1x8x32xbf16, #tpu.memory_space<vmem>>, %arg8: memref<1x32xf32, #tpu.memory_space<vmem>>, %arg9: memref<1x8x32xf32, #tpu.memory_space<vmem>>, %arg10: memref<8x32xf32, #tpu.memory_space<vmem>>, %arg11: memref<8x1xf32, #tpu.memory_space<vmem>>, %arg12: memref<8x1xf32, #tpu.memory_space<vmem>>, %arg13: memref<8x8xf32, #tpu.memory_space<vmem>>) attributes {dimension_semantics = [#tpu.dimension_semantics<parallel>, #tpu.dimension_semantics<parallel>, #tpu.dimension_semantics<arbitrary>, #tpu.dimension_semantics<arbitrary>], iteration_bounds = array<i64: 2, 1, 4, 1>, scalar_prefetch = 0 : i64, scratch_operands = 4 : i64, tpu.core_type = #tpu.core_type<tc>, window_params = [{transform_indices = @transform_0, window_bounds = array<i64: 1, 1, 8, 8>}, {transform_indices = @transform_1, window_bounds = array<i64: 1, 1, 8, 8>}, {transform_indices = @transform_2, window_bounds = array<i64: 1, 1, 8, 8>}, {transform_indices = @transform_3, window_bounds = array<i64: 1, 8, 32>}, {pipeline_mode = #tpu.pipeline_mode<synchronous>, transform_indices = @transform_4, window_bounds = array<i64: 1, 32>}, {transform_indices = @transform_5, window_bounds = array<i64: 1, 8, 32>}]} {
    %c0_i32 = arith.constant 0 : i32
    %0 = arith.cmpi eq, %arg2, %c0_i32 : i32
    %c0_i32_0 = arith.constant 0 : i32
    %1 = arith.cmpi eq, %arg3, %c0_i32_0 : i32
    %2 = arith.andi %0, %1 : i1
    %3 = arith.extui %2 : i1 to i32
    %c0_i32_1 = arith.constant 0 : i32
    %4 = arith.cmpi ne, %3, %c0_i32_1 : i32
    scf.if %4 {
      %cst_34 = arith.constant 0.000000e+00 : f32
      %46 = vector.broadcast %cst_34 : f32 to vector<8x32xf32>
      %c0_35 = arith.constant 0 : index
      %c0_36 = arith.constant 0 : index
      %47 = vector.load %arg10[%c0_35, %c0_36] : memref<8x32xf32, #tpu.memory_space<vmem>>, vector<8x32xf32>
      tpu.vector_store %arg10[%c0_35, %c0_36], %46 {strides = array<i32>} : memref<8x32xf32, #tpu.memory_space<vmem>>, vector<8x32xf32>,
    } else {
    }
    %c0_i32_2 = arith.constant 0 : i32
    %5 = arith.cmpi eq, %arg3, %c0_i32_2 : i32
    %6 = arith.extui %5 : i1 to i32
    %c0_i32_3 = arith.constant 0 : i32
    %7 = arith.cmpi ne, %6, %c0_i32_3 : i32
    scf.if %7 {
      %cst_34 = arith.constant 0xFF800000 : f32
      %46 = vector.broadcast %cst_34 : f32 to vector<8x1xf32>
      %c0_35 = arith.constant 0 : index
      %c0_36 = arith.constant 0 : index
      %47 = vector.load %arg11[%c0_35, %c0_36] : memref<8x1xf32, #tpu.memory_space<vmem>>, vector<8x1xf32>
      tpu.vector_store %arg11[%c0_35, %c0_36], %46 {strides = array<i32>} : memref<8x1xf32, #tpu.memory_space<vmem>>, vector<8x1xf32>,
      %cst_37 = arith.constant 0.000000e+00 : f32
      %48 = vector.broadcast %cst_37 : f32 to vector<8x1xf32>
      %c0_38 = arith.constant 0 : index
      %c0_39 = arith.constant 0 : index
      %49 = vector.load %arg12[%c0_38, %c0_39] : memref<8x1xf32, #tpu.memory_space<vmem>>, vector<8x1xf32>
      tpu.vector_store %arg12[%c0_38, %c0_39], %48 {strides = array<i32>} : memref<8x1xf32, #tpu.memory_space<vmem>>, vector<8x1xf32>,
      %cst_40 = arith.constant 0.000000e+00 : f32
      %50 = vector.broadcast %cst_40 : f32 to vector<8x8xf32>
      %c0_41 = arith.constant 0 : index
      %c0_42 = arith.constant 0 : index
      %51 = vector.load %arg13[%c0_41, %c0_42] : memref<8x8xf32, #tpu.memory_space<vmem>>, vector<8x8xf32>
      tpu.vector_store %arg13[%c0_41, %c0_42], %50 {strides = array<i32>} : memref<8x8xf32, #tpu.memory_space<vmem>>, vector<8x8xf32>,
    } else {
    }
    %c0 = arith.constant 0 : index
    %c0_4 = arith.constant 0 : index
    %c0_5 = arith.constant 0 : index
    %c0_6 = arith.constant 0 : index
    %8 = vector.load %arg4[%c0, %c0_4, %c0_5, %c0_6] : memref<1x1x8x8xbf16, #tpu.memory_space<vmem>>, vector<1x1x8x8xbf16>
    %9 = vector.shape_cast %8 : vector<1x1x8x8xbf16> to vector<8x8xbf16>
    %c0_7 = arith.constant 0 : index
    %c0_8 = arith.constant 0 : index
    %c0_9 = arith.constant 0 : index
    %c0_10 = arith.constant 0 : index
    %10 = vector.load %arg5[%c0_7, %c0_8, %c0_9, %c0_10] : memref<1x1x8x8xbf16, #tpu.memory_space<vmem>>, vector<1x1x8x8xbf16>
    %11 = vector.shape_cast %10 : vector<1x1x8x8xbf16> to vector<8x8xbf16>
    %cst = arith.constant dense<0.000000e+00> : vector<8x8xf32>
    %12 = tpu.matmul %9, %11, %cst {dimension_numbers = #tpu.dot_dimension_numbers<[1], [1], [0], [0], [0, 0, 1, 0], [], []>} : vector<8x8xbf16>, vector<8x8xbf16>, vector<8x8xf32> -> vector<8x8xf32>
    %c0_11 = arith.constant 0 : index
    %c0_12 = arith.constant 0 : index
    %13 = vector.load %arg11[%c0_11, %c0_12] : memref<8x1xf32, #tpu.memory_space<vmem>>, vector<8x1xf32>
    %cst_13 = arith.constant dense<0xFF800000> : vector<8xf32>
    %14 = vector.multi_reduction <maximumf>, %12, %cst_13 [1] : vector<8x8xf32> to vector<8xf32>
    %15 = vector.shape_cast %14 : vector<8xf32> to vector<8x1xf32>
    %16 = arith.maximumf %13, %15 : vector<8x1xf32>
    %17 = arith.subf %13, %16 : vector<8x1xf32>
    %18 = math.exp %17 : vector<8x1xf32>
    %19 = vector.broadcast %16 : vector<8x1xf32> to vector<8x8xf32>
    %20 = arith.subf %12, %19 : vector<8x8xf32>
    %21 = math.exp %20 : vector<8x8xf32>
    %c0_14 = arith.constant 0 : index
    %c0_15 = arith.constant 0 : index
    %22 = vector.load %arg12[%c0_14, %c0_15] : memref<8x1xf32, #tpu.memory_space<vmem>>, vector<8x1xf32>
    %23 = arith.mulf %18, %22 : vector<8x1xf32>
    %cst_16 = arith.constant dense<0.000000e+00> : vector<8xf32>
    %24 = vector.multi_reduction <add>, %21, %cst_16 [1] : vector<8x8xf32> to vector<8xf32>
    %25 = vector.shape_cast %24 : vector<8xf32> to vector<8x1xf32>
    %26 = arith.addf %23, %25 : vector<8x1xf32>
    %c0_17 = arith.constant 0 : index
    %c0_18 = arith.constant 0 : index
    %27 = vector.load %arg12[%c0_17, %c0_18] : memref<8x1xf32, #tpu.memory_space<vmem>>, vector<8x1xf32>
    tpu.vector_store %arg12[%c0_17, %c0_18], %26 {strides = array<i32>} : memref<8x1xf32, #tpu.memory_space<vmem>>, vector<8x1xf32>,
    %c0_19 = arith.constant 0 : index
    %c0_20 = arith.constant 0 : index
    %28 = vector.load %arg13[%c0_19, %c0_20] : memref<8x8xf32, #tpu.memory_space<vmem>>, vector<8x8xf32>
    %29 = vector.broadcast %18 : vector<8x1xf32> to vector<8x8xf32>
    %30 = arith.mulf %29, %28 : vector<8x8xf32>
    %31 = arith.truncf %21 : vector<8x8xf32> to vector<8x8xbf16>
    %c0_21 = arith.constant 0 : index
    %c0_22 = arith.constant 0 : index
    %c0_23 = arith.constant 0 : index
    %c0_24 = arith.constant 0 : index
    %32 = vector.load %arg6[%c0_21, %c0_22, %c0_23, %c0_24] : memref<1x1x8x8xbf16, #tpu.memory_space<vmem>>, vector<1x1x8x8xbf16>
    %33 = vector.shape_cast %32 : vector<1x1x8x8xbf16> to vector<8x8xbf16>
    %cst_25 = arith.constant dense<0.000000e+00> : vector<8x8xf32>
    %34 = tpu.matmul %31, %33, %cst_25 {dimension_numbers = #tpu.dot_dimension_numbers<[1], [0], [0], [1], [0, 0, 1, 1], [], []>} : vector<8x8xbf16>, vector<8x8xbf16>, vector<8x8xf32> -> vector<8x8xf32>
    %35 = arith.addf %30, %34 : vector<8x8xf32>
    %c0_26 = arith.constant 0 : index
    %c0_27 = arith.constant 0 : index
    %36 = vector.load %arg13[%c0_26, %c0_27] : memref<8x8xf32, #tpu.memory_space<vmem>>, vector<8x8xf32>
    tpu.vector_store %arg13[%c0_26, %c0_27], %35 {strides = array<i32>} : memref<8x8xf32, #tpu.memory_space<vmem>>, vector<8x8xf32>,
    %c0_28 = arith.constant 0 : index
    %c0_29 = arith.constant 0 : index
    %37 = vector.load %arg11[%c0_28, %c0_29] : memref<8x1xf32, #tpu.memory_space<vmem>>, vector<8x1xf32>
    tpu.vector_store %arg11[%c0_28, %c0_29], %16 {strides = array<i32>} : memref<8x1xf32, #tpu.memory_space<vmem>>, vector<8x1xf32>,
    %c0_i32_30 = arith.constant 0 : i32
    %38 = arith.cmpi eq, %arg3, %c0_i32_30 : i32
    %39 = arith.extui %38 : i1 to i32
    %c0_i32_31 = arith.constant 0 : i32
    %40 = arith.cmpi ne, %39, %c0_i32_31 : i32
    scf.if %40 {
      %c0_34 = arith.constant 0 : index
      %c0_35 = arith.constant 0 : index
      %46 = vector.load %arg13[%c0_34, %c0_35] : memref<8x8xf32, #tpu.memory_space<vmem>>, vector<8x8xf32>
      %c0_36 = arith.constant 0 : index
      %c0_37 = arith.constant 0 : index
      %47 = vector.load %arg12[%c0_36, %c0_37] : memref<8x1xf32, #tpu.memory_space<vmem>>, vector<8x1xf32>
      %48 = tpu.reciprocal %47 {approx = true} : vector<8x1xf32> -> vector<8x1xf32>
      %49 = vector.broadcast %48 : vector<8x1xf32> to vector<8x8xf32>
      %50 = arith.mulf %46, %49 : vector<8x8xf32>
      %c0_38 = arith.constant 0 : index
      %c0_39 = arith.constant 0 : index
      %51 = vector.load %arg10[%c0_38, %c0_39] : memref<8x32xf32, #tpu.memory_space<vmem>>, vector<8x32xf32>
      %52 = arith.truncf %50 : vector<8x8xf32> to vector<8x8xbf16>
      %c0_40 = arith.constant 0 : index
      %c0_41 = arith.constant 0 : index
      %c0_42 = arith.constant 0 : index
      %53 = vector.load %arg7[%c0_40, %c0_41, %c0_42] : memref<1x8x32xbf16, #tpu.memory_space<vmem>>, vector<1x8x32xbf16>
      %54 = vector.shape_cast %53 : vector<1x8x32xbf16> to vector<8x32xbf16>
      %cst_43 = arith.constant dense<0.000000e+00> : vector<8x32xf32>
      %55 = tpu.matmul %52, %54, %cst_43 {dimension_numbers = #tpu.dot_dimension_numbers<[1], [0], [0], [1], [0, 0, 1, 1], [], []>} : vector<8x8xbf16>, vector<8x32xbf16>, vector<8x32xf32> -> vector<8x32xf32>
      %56 = arith.addf %51, %55 : vector<8x32xf32>
      %c0_44 = arith.constant 0 : index
      %c0_45 = arith.constant 0 : index
      %57 = vector.load %arg10[%c0_44, %c0_45] : memref<8x32xf32, #tpu.memory_space<vmem>>, vector<8x32xf32>
      tpu.vector_store %arg10[%c0_44, %c0_45], %56 {strides = array<i32>} : memref<8x32xf32, #tpu.memory_space<vmem>>, vector<8x32xf32>,
    } else {
    }
    %c3_i32 = arith.constant 3 : i32
    %41 = arith.cmpi eq, %arg2, %c3_i32 : i32
    %c0_i32_32 = arith.constant 0 : i32
    %42 = arith.cmpi eq, %arg3, %c0_i32_32 : i32
    %43 = arith.andi %41, %42 : i1
    %44 = arith.extui %43 : i1 to i32
    %c0_i32_33 = arith.constant 0 : i32
    %45 = arith.cmpi ne, %44, %c0_i32_33 : i32
    scf.if %45 {
      %c0_34 = arith.constant 0 : index
      %c0_35 = arith.constant 0 : index
      %46 = vector.load %arg10[%c0_34, %c0_35] : memref<8x32xf32, #tpu.memory_space<vmem>>, vector<8x32xf32>
      %c0_36 = arith.constant 0 : index
      %c0_37 = arith.constant 0 : index
      %47 = vector.load %arg8[%c0_36, %c0_37] : memref<1x32xf32, #tpu.memory_space<vmem>>, vector<1x32xf32>
      %48 = vector.broadcast %47 : vector<1x32xf32> to vector<8x32xf32>
      %49 = arith.addf %46, %48 : vector<8x32xf32>
      %c0_38 = arith.constant 0 : index
      %c0_39 = arith.constant 0 : index
      %c0_40 = arith.constant 0 : index
      %50 = vector.load %arg9[%c0_38, %c0_39, %c0_40] : memref<1x8x32xf32, #tpu.memory_space<vmem>>, vector<1x8x32xf32>
      %51 = vector.shape_cast %50 : vector<1x8x32xf32> to vector<8x32xf32>
      %52 = vector.shape_cast %49 : vector<8x32xf32> to vector<1x8x32xf32>
      tpu.vector_store %arg9[%c0_38, %c0_39, %c0_40], %52 {strides = array<i32>} : memref<1x8x32xf32, #tpu.memory_space<vmem>>, vector<1x8x32xf32>,
    } else {
    }
    return
  }
  func.func @transform_0(%arg0: i32, %arg1: i32, %arg2: i32, %arg3: i32) -> (i32, i32, i32, i32) {
    %c0_i32 = arith.constant 0 : i32
    %c0_i32_0 = arith.constant 0 : i32
    return %arg0, %arg2, %arg1, %c0_i32 : i32, i32, i32, i32
  }
  func.func @transform_1(%arg0: i32, %arg1: i32, %arg2: i32, %arg3: i32) -> (i32, i32, i32, i32) {
    %c0_i32 = arith.constant 0 : i32
    %c0_i32_0 = arith.constant 0 : i32
    return %arg0, %arg2, %arg3, %c0_i32 : i32, i32, i32, i32
  }
  func.func @transform_2(%arg0: i32, %arg1: i32, %arg2: i32, %arg3: i32) -> (i32, i32, i32, i32) {
    %c0_i32 = arith.constant 0 : i32
    %c0_i32_0 = arith.constant 0 : i32
    return %arg0, %arg2, %arg3, %c0_i32 : i32, i32, i32, i32
  }
  func.func @transform_3(%arg0: i32, %arg1: i32, %arg2: i32, %arg3: i32) -> (i32, i32, i32) {
    %c0_i32 = arith.constant 0 : i32
    %c0_i32_0 = arith.constant 0 : i32
    %c0_i32_1 = arith.constant 0 : i32
    return %arg2, %c0_i32, %c0_i32_0 : i32, i32, i32
  }
  func.func @transform_4(%arg0: i32, %arg1: i32, %arg2: i32, %arg3: i32) -> (i32, i32) {
    %c0_i32 = arith.constant 0 : i32
    %c0_i32_0 = arith.constant 0 : i32
    %c0_i32_1 = arith.constant 0 : i32
    return %c0_i32, %c0_i32_0 : i32, i32
  }
  func.func @transform_5(%arg0: i32, %arg1: i32, %arg2: i32, %arg3: i32) -> (i32, i32, i32) {
    %c0_i32 = arith.constant 0 : i32
    %c0_i32_0 = arith.constant 0 : i32
    return %arg0, %arg1, %c0_i32 : i32, i32, i32
  }
}

</mosaic_0001>

<llo_original>
// kernel: self_attention_pallas.2
$region0: #{self_attention_pallas.2}
  #allocation0 [shape = 'u32[]', space=smem, size = 0x4, offset = 0x4, fixed_abs, tag = 'smem constant byte address 0x4 - core index']
  #allocation1 [shape = 'u32[144,128]{1,0:T(1,128)}', space=vmem, size = 0x12000, scoped, tag = 'internal scratch']
  %s0 = inlined_call_operand.vmem [shape: bf16[2,8,32], index: 0, kind: input, shape index: {}]
  %s1 = inlined_call_operand.vmem [shape: bf16[32,96], index: 1, kind: input, shape index: {}]
  %s2 = inlined_call_operand.vmem [shape: f32[1,96], index: 2, kind: input, shape index: {}]
  %s3 = inlined_call_operand.vmem [shape: bf16[2,8,96], index: 3, kind: output, shape index: {}]
  %s4 = sld [smem:[#allocation0]]
  $region45: #{self_attention_pallas.2} parent=0
    _
  %s6 = ssub.s32 1, %s4
  %s7 = scalar_select 0, %s6, %s4
  loop: start=0, step=1, limit=4
  $region2: #{self_attention_pallas.2} parent=0 // loop_pre_header
    _
  $region3: #{self_attention_pallas.2} parent=0 // loop_header
    %s9 = sphi 0, %s13
    %p10 = scmp.ge.s32.totalorder %s9, 4
    %s16 = sphi 0, %s28
    %s17 = sphi 0, %s24
    %s18 = sphi 0, %s16
    %s19 = sphi 0, %s17
    %s20 = sphi 0, %s18
    %s21 = sphi 0, %s19
    %s33 = sphi 0, %s35
    %s36 = sphi 0, %s33
    %s37 = sphi 0, %s36
    %s53 = sphi 0, %s37
    %s57 = sphi 0, %s57
    %s59 = sphi 0, %s57
    %s60 = sphi 0, %s59
    %s74 = sphi 0, %s60
    %s78 = sphi 0, %s78
    %s80 = sphi 0, %s78
    %s81 = sphi 0, %s80
    %s95 = sphi 0, %s81
    %s103 = sphi 0, %s105
    %s106 = sphi 0, %s103
    %s107 = sphi 0, %s106
    %s123 = sphi 0, %s107
  $region4: #{self_attention_pallas.2} parent=0 // loop_header_branch
    %12 = sbr.rel (%p10) target = $region8
  $region5: #{self_attention_pallas.2} parent=0 // loop_body
    %s14 = ssub.s32 %s9, 1
    %s15 = ssub.s32 %s9, 2
    %s22 = sadd.s32 1, %s17
    %p23 = scmp.ge.s32.totalorder %s22, 1
    %s24 = scalar_select %p23, 0, %s22
    %s25 = sadd.s32 1, %s16
    %s26 = scalar_select %p23, %s25, %s16
    %p27 = scmp.ge.s32.totalorder %s26, 2
    %s28 = scalar_select %p27, 0, %s26
    %s29 = ssub.s32 %s16, %s28
    %s30 = ssub.s32 %s17, %s24
    %s31 = sor.u32 %s29, %s30
    %p32 = scmp.eq.s32.totalorder %s31, 0
    %s34 = sadd.s32 %s33, 1
    %s35 = scalar_select %p32, %s33, %s34
    %p38 = pneg %p32
    %p39 = scmp.eq.s32.totalorder %s9, 1
    %p40 = por %p38, %p39
    %p41 = scmp.ne.s32.totalorder %s33, %s36
    %p42 = scmp.eq.s32.totalorder %s9, 0
    %p43 = por %p41, %p42
    %p44 = scmp.ne.s32.totalorder %s33, %s36
    %p45 = scmp.eq.s32.totalorder %s14, 1
    %p46 = por %p44, %p45
    %p47 = scmp.ne.s32.totalorder %s36, %s37
    %p48 = scmp.eq.s32.totalorder %s14, 0
    %p49 = por %p47, %p48
    %p50 = scmp.ne.s32.totalorder %s36, %s37
    %p51 = scmp.eq.s32.totalorder %s15, 1
    %p52 = por %p50, %p51
    %p54 = scmp.ne.s32.totalorder %s37, %s53
    %p55 = scmp.eq.s32.totalorder %s15, 0
    %p56 = por %p54, %p55
    %s58 = sadd.s32 %s57, 1
    %p61 = scmp.eq.s32.totalorder %s9, 1
    %p62 = scmp.ne.s32.totalorder %s57, %s59
    %p63 = scmp.eq.s32.totalorder %s9, 0
    %p64 = por %p62, %p63
    %p65 = scmp.ne.s32.totalorder %s57, %s59
    %p66 = scmp.eq.s32.totalorder %s14, 1
    %p67 = por %p65, %p66
    %p68 = scmp.ne.s32.totalorder %s59, %s60
    %p69 = scmp.eq.s32.totalorder %s14, 0
    %p70 = por %p68, %p69
    %p71 = scmp.ne.s32.totalorder %s59, %s60
    %p72 = scmp.eq.s32.totalorder %s15, 1
    %p73 = por %p71, %p72
    %p75 = scmp.ne.s32.totalorder %s60, %s74
    %p76 = scmp.eq.s32.totalorder %s15, 0
    %p77 = por %p75, %p76
    %s79 = sadd.s32 %s78, 1
    %p82 = scmp.eq.s32.totalorder %s9, 1
    %p83 = scmp.ne.s32.totalorder %s78, %s80
    %p84 = scmp.eq.s32.totalorder %s9, 0
    %p85 = por %p83, %p84
    %p86 = scmp.ne.s32.totalorder %s78, %s80
    %p87 = scmp.eq.s32.totalorder %s14, 1
    %p88 = por %p86, %p87
    %p89 = scmp.ne.s32.totalorder %s80, %s81
    %p90 = scmp.eq.s32.totalorder %s14, 0
    %p91 = por %p89, %p90
    %p92 = scmp.ne.s32.totalorder %s80, %s81
    %p93 = scmp.eq.s32.totalorder %s15, 1
    %p94 = por %p92, %p93
    %p96 = scmp.ne.s32.totalorder %s81, %s95
    %p97 = scmp.eq.s32.totalorder %s15, 0
    %p98 = por %p96, %p97
    %s99 = ssub.s32 %s16, %s28
    %s100 = ssub.s32 %s17, %s24
    %s101 = sor.u32 %s99, %s100
    %p102 = scmp.eq.s32.totalorder %s101, 0
    %s104 = sadd.s32 %s103, 1
    %s105 = scalar_select %p102, %s103, %s104
    %p108 = pneg %p102
    %p109 = scmp.eq.s32.totalorder %s9, 1
    %p110 = por %p108, %p109
    %p111 = scmp.ne.s32.totalorder %s103, %s106
    %p112 = scmp.eq.s32.totalorder %s9, 0
    %p113 = por %p111, %p112
    %p114 = scmp.ne.s32.totalorder %s103, %s106
    %p115 = scmp.eq.s32.totalorder %s14, 1
    %p116 = por %p114, %p115
    %p117 = scmp.ne.s32.totalorder %s106, %s107
    %p118 = scmp.eq.s32.totalorder %s14, 0
    %p119 = por %p117, %p118
    %p120 = scmp.ne.s32.totalorder %s106, %s107
    %p121 = scmp.eq.s32.totalorder %s15, 1
    %p122 = por %p120, %p121
    %p124 = scmp.ne.s32.totalorder %s107, %s123
    %p125 = scmp.eq.s32.totalorder %s15, 0
    %p126 = por %p124, %p125
    %p127 = scmp.le.s32.totalorder 1, %s9
    %p128 = scmp.lt.s32.totalorder %s9, 3
    %p129 = pnand %p127, %p128
    %p130 = pneg %p129
    // Predicated region
    $region9: #{self_attention_pallas.2} parent=5 // pred_check
      _
    $region10: #{self_attention_pallas.2} parent=5 // pred_check_branch
      %132 = sbr.rel (%p129) target = $region12
    $region11: #{self_attention_pallas.2} parent=5 // pred_region
      %s133 = ssub.s32 %s9, 1
      // Predicated region
      $region13: #{self_attention_pallas.2} parent=11 // pred_check
        %p134 = pneg %p70
      $region14: #{self_attention_pallas.2} parent=11 // pred_check_branch
        %136 = sbr.rel (%p134) target = $region16
      $region15: #{self_attention_pallas.2} parent=11 // pred_region
        _
      $region16: #{self_attention_pallas.2} parent=11 // pred_fallthru
        _
      // Predicated region
      $region17: #{self_attention_pallas.2} parent=11 // pred_check
        %p137 = pneg %p91
      $region18: #{self_attention_pallas.2} parent=11 // pred_check_branch
        %139 = sbr.rel (%p137) target = $region20
      $region19: #{self_attention_pallas.2} parent=11 // pred_region
        _
      $region20: #{self_attention_pallas.2} parent=11 // pred_fallthru
        _
    $region12: #{self_attention_pallas.2} parent=5 // pred_fallthru
      _
    %p140 = scmp.lt.s32.totalorder %s9, 2
    // Predicated region
    $region21: #{self_attention_pallas.2} parent=5 // pred_check
      %p141 = pneg %p140
    $region22: #{self_attention_pallas.2} parent=5 // pred_check_branch
      %143 = sbr.rel (%p141) target = $region24
    $region23: #{self_attention_pallas.2} parent=5 // pred_region
      // Predicated region
      $region25: #{self_attention_pallas.2} parent=23 // pred_check
        %p144 = pneg %p43
      $region26: #{self_attention_pallas.2} parent=23 // pred_check_branch
        %146 = sbr.rel (%p144) target = $region28
      $region27: #{self_attention_pallas.2} parent=23 // pred_region
        %p147 = scmp.lt.s32.totalorder %s16, 1
        %s148 = scalar_select %p147, %s16, 1
        %p149 = scmp.lt.s32.totalorder %s17, 0
        %s150 = scalar_select %p149, %s17, 0
        %s151 = sadd.s32 %s150, %s148
        %s152 = smul.addr %s151, 4
        %s153 = scalar_lea.vmem %s0, %s152
      $region28: #{self_attention_pallas.2} parent=23 // pred_fallthru
        _
    $region24: #{self_attention_pallas.2} parent=5 // pred_fallthru
      _
    %p154 = scmp.le.s32.totalorder 1, %s9
    %p155 = scmp.lt.s32.totalorder %s9, 3
    %p156 = pnand %p154, %p155
    %p157 = pneg %p156
    // Predicated region
    $region29: #{self_attention_pallas.2} parent=5 // pred_check
      _
    $region30: #{self_attention_pallas.2} parent=5 // pred_check_branch
      %159 = sbr.rel (%p156) target = $region32
    $region31: #{self_attention_pallas.2} parent=5 // pred_region
      %s160 = ssub.s32 %s9, 1
      %p161 = scmp.lt.s32.totalorder %s18, 1
      %s162 = scalar_select %p161, %s18, 1
      %p163 = scmp.lt.s32.totalorder %s19, 0
      %s164 = scalar_select %p163, %s19, 0
      %s165 = sadd.s32 %s164, %s162
      %s166 = smul.addr %s165, 4
      %s167 = scalar_lea.vmem %s0, %s166
      %p168 = pneg %p49
      %p169 = pneg %p46
      %p170 = pneg %p70
      %p171 = pneg %p67
      %p172 = pneg %p91
      %p173 = pneg %p88
      %p174 = pneg %p119
      %p175 = pneg %p116
      %p176 = scmp.lt.s32.totalorder %s18, 1
      %s177 = scalar_select %p176, %s18, 1
      %p178 = scmp.lt.s32.totalorder %s19, 0
      %s179 = scalar_select %p178, %s19, 0
      %s180 = sadd.s32 %s179, %s177
      %s181 = smul.addr %s180, 4
      %s182 = scalar_lea.vmem %s3, %s181
      %p183 = scmp.lt.s32.totalorder %s18, 1
      %s184 = scalar_select %p183, %s18, 1
      %p185 = scmp.lt.s32.totalorder %s19, 0
      %s186 = scalar_select %p185, %s19, 0
      %s187 = sadd.s32 %s186, %s184
      %s188 = smul.addr %s187, 4
      %s189 = scalar_lea.vmem %s0, %s188
      %p190 = scmp.lt.s32.totalorder %s18, 1
      %s191 = scalar_select %p190, %s18, 1
      %p192 = scmp.lt.s32.totalorder %s19, 0
      %s193 = scalar_select %p192, %s19, 0
      %s194 = sadd.s32 %s193, %s191
      %s195 = smul.addr %s194, 4
      %s196 = scalar_lea.vmem %s3, %s195
      %v198 = vld [vmem:[%s189] sm:$0xf]
      %v199 = vld [vmem:[%s1] sm:$0xf]
      %v200 = vld [vmem:[%s1 + $0x4] sm:$0xf]
      %v201 = vld [vmem:[%s1 + $0x8] sm:$0xf]
      %v202 = vld [vmem:[%s1 + $0xc] sm:$0xf]
      %v203 = vld [vmem:[%s2] sm:$0x1]
      %v205 = vlaneseq
      %v206 = vshrl.u32 %v205, 7
      %v207 = vsub.s32 0, %v206
      %v208 = vrot.slane %v203, %v207
      %v214 = vunpack.c.l.b16 %v199
      %v215 = vunpack.c.l.b16 %v200
      %v216 = vunpack.c.l.b16 %v201
      %v217 = vunpack.c.l.b16 %v202
      %v218 = vpack.c.b16 %v215, %v214
      %v219 = vpack.c.b16 %v217, %v216
      %vm222 = vcmask 261120
      %v224 = vsel %vm222, %v198, 0
      %226 = vmatprep.subr.bf16.mxu0 0
      %227 = vmatpush1.bf16.msra.mxu0 %v218
      %228 = vmatprep.subr.bf16.mxu0 0
      %229 = vmatpush1.bf16.msra.mxu0 %v219
      %230 = vmatprep.subr.bf16.mxu0 0
      %231 = vmatpush1.bf16.msra.mxu0 0
      %232 = vmatprep.subr.bf16.mxu0 0
      %233 = vmatpush1.bf16.msra.mxu0 0
      %234 = vmatprep.subr.bf16.mxu0 0
      %235 = vmatpush1.bf16.msra.mxu0 0
      %236 = vmatprep.subr.bf16.mxu0 0
      %237 = vmatpush1.bf16.msra.mxu0 0
      %238 = vmatprep.subr.bf16.mxu0 0
      %239 = vmatpush1.bf16.msra.mxu0 0
      %240 = vmatprep.subr.bf16.mxu0 0
      %241 = vmatpush1.bf16.msra.mxu0 0
      %242 = vmatprep.subr.bf16.mxu0 0
      %243 = vmatpush1.bf16.msra.mxu0 0
      %244 = vmatprep.subr.bf16.mxu0 0
      %245 = vmatpush1.bf16.msra.mxu0 0
      %246 = vmatprep.subr.bf16.mxu0 0
      %247 = vmatpush1.bf16.msra.mxu0 0
      %248 = vmatprep.subr.bf16.mxu0 0
      %249 = vmatpush1.bf16.msra.mxu0 0
      %250 = vmatprep.subr.bf16.mxu0 0
      %251 = vmatpush1.bf16.msra.mxu0 0
      %252 = vmatprep.subr.bf16.mxu0 0
      %253 = vmatpush1.bf16.msra.mxu0 0
      %254 = vmatprep.subr.bf16.mxu0 0
      %255 = vmatpush1.bf16.msra.mxu0 0
      %256 = vmatprep.subr.bf16.mxu0 0
      %257 = vmatpush1.bf16.msra.mxu0 0
      %258 = vmatprep.mubr.bf16.mxu0 0
      %259 = vmatmul.mubr.bf16.gmra.mrb[0].mxu0 %v224
      %v260 = vpop.f32.mrb[0].mxu0
      %v261 = vadd.f32 %v208, %v260
      %v262 = vpop.f32.mrb[0].mxu0
      %v263 = vpop.f32.mrb[0].mxu0
      %v264 = vpop.f32.mrb[0].mxu0
      %265 = vdwg.mxu0
      %v266 = vpack.c.bf16 %v261, %v261
      %vm267 = vcmask 781312
      %268 = vst.msk [vmem:[%s196] sm:$0xf] %vm267, %v266
      %p269 = scmp.lt.s32.totalorder %s18, 1
      %s270 = scalar_select %p269, %s18, 1
      %p271 = scmp.lt.s32.totalorder %s19, 0
      %s272 = scalar_select %p271, %s19, 0
      %s273 = sadd.s32 %s272, %s270
      %s274 = smul.addr %s273, 4
      %s275 = scalar_lea.vmem %s3, %s274
      // Predicated region
      $region33: #{self_attention_pallas.2} parent=31 // pred_check
        %p276 = pneg %p116
      $region34: #{self_attention_pallas.2} parent=31 // pred_check_branch
        %278 = sbr.rel (%p276) target = $region36
      $region35: #{self_attention_pallas.2} parent=31 // pred_region
        _
      $region36: #{self_attention_pallas.2} parent=31 // pred_fallthru
        _
    $region32: #{self_attention_pallas.2} parent=5 // pred_fallthru
      _
    %p279 = scmp.le.s32.totalorder 2, %s9
    // Predicated region
    $region37: #{self_attention_pallas.2} parent=5 // pred_check
      %p280 = pneg %p279
    $region38: #{self_attention_pallas.2} parent=5 // pred_check_branch
      %282 = sbr.rel (%p280) target = $region40
    $region39: #{self_attention_pallas.2} parent=5 // pred_region
      %s283 = ssub.s32 %s9, 2
      // Predicated region
      $region41: #{self_attention_pallas.2} parent=39 // pred_check
        %p284 = pneg %p122
      $region42: #{self_attention_pallas.2} parent=39 // pred_check_branch
        %286 = sbr.rel (%p284) target = $region44
      $region43: #{self_attention_pallas.2} parent=39 // pred_region
        %p287 = scmp.lt.s32.totalorder %s20, 1
        %s288 = scalar_select %p287, %s20, 1
        %p289 = scmp.lt.s32.totalorder %s21, 0
        %s290 = scalar_select %p289, %s21, 0
        %s291 = sadd.s32 %s290, %s288
        %s292 = smul.addr %s291, 4
        %s293 = scalar_lea.vmem %s3, %s292
      $region44: #{self_attention_pallas.2} parent=39 // pred_fallthru
        _
    $region40: #{self_attention_pallas.2} parent=5 // pred_fallthru
      _
  $region6: #{self_attention_pallas.2} parent=0 // loop_footer
    %s13 = sadd.s32 1, %s9
  $region7: #{self_attention_pallas.2} parent=0 // loop_footer_branch
    %8 = sbr.rel target = $region3
  $region8: #{self_attention_pallas.2} parent=0 // loop_exit
    _

// kernel: self_attention_pallas.3
$region0: #{self_attention_pallas.3}
  #allocation0 [shape = 'u32[]', space=smem, size = 0x4, offset = 0x4, fixed_abs, tag = 'smem constant byte address 0x4 - core index']
  #allocation1 [shape = 'u32[144,128]{1,0:T(1,128)}', space=vmem, size = 0x12000, scoped, tag = 'internal scratch']
  #allocation2 [shape = 'f32[8,32]{1,0:T(8,128)}', space=vmem, size = 0x1000, scoped, tag = 'scratch operand']
  #allocation3 [shape = 'f32[8,1]{1,0:T(8,128)}', space=vmem, size = 0x1000, scoped, tag = 'scratch operand']
  #allocation4 [shape = 'f32[8,1]{1,0:T(8,128)}', space=vmem, size = 0x1000, scoped, tag = 'scratch operand']
  #allocation5 [shape = 'f32[8,8]{1,0:T(8,128)}', space=vmem, size = 0x1000, scoped, tag = 'scratch operand']
  %s0 = inlined_call_operand.vmem [shape: bf16[2,4,8,8], index: 0, kind: input, shape index: {}]
  %s1 = inlined_call_operand.vmem [shape: bf16[2,4,8,8], index: 1, kind: input, shape index: {}]
  %s2 = inlined_call_operand.vmem [shape: bf16[2,4,8,8], index: 2, kind: input, shape index: {}]
  %s3 = inlined_call_operand.vmem [shape: bf16[4,8,32], index: 3, kind: input, shape index: {}]
  %s4 = inlined_call_operand.vmem [shape: f32[1,32], index: 4, kind: input, shape index: {}]
  %s5 = inlined_call_operand.hbm [shape: f32[2,8,32], index: 5, kind: output, shape index: {}]
  %s6 = sld [smem:[#allocation0]]
  $region69: #{self_attention_pallas.3} parent=0
    _
  %s8 = ssub.s32 1, %s6
  %s9 = scalar_select 0, %s8, %s6
  $region1: #{self_attention_pallas.3} parent=0
    #allocation6 [shape = 'u8[8192]{0}', space=vmem, size = 0x2000, scoped, tag = 'output window, operand 0']
    #allocation7 [shape = 's32[2]{0}', space=sflag, size = 0x8, scoped, tag = 'scoped memory for self_attention_pallas.3']
    %10 = vsyncpa [#allocation7], 0
    %s11 = scalar_lea.sflag [#allocation7], 1
    %12 = vsyncpa %s11, 0
    loop: start=0, step=1, limit=10
    $region2: #{self_attention_pallas.3} parent=1 // loop_pre_header
      _
    $region3: #{self_attention_pallas.3} parent=1 // loop_header
      %s14 = sphi 0, %s18
      %p15 = scmp.ge.s32.totalorder %s14, 10
      %s21 = sphi 0, %s47
      %s22 = sphi 0, %s43
      %s23 = sphi 0, %s39
      %s24 = sphi 0, %s35
      %s25 = sphi 0, %s21
      %s26 = sphi 0, %s22
      %s27 = sphi 0, %s23
      %s28 = sphi 0, %s24
      %s29 = sphi 0, %s25
      %s30 = sphi 0, %s26
      %s31 = sphi 0, %s27
      %s32 = sphi 0, %s28
      %s54 = sphi 0, %s56
      %s57 = sphi 0, %s54
      %s58 = sphi 0, %s57
      %s74 = sphi 0, %s58
      %s84 = sphi 0, %s86
      %s87 = sphi 0, %s84
      %s88 = sphi 0, %s87
      %s104 = sphi 0, %s88
      %s114 = sphi 0, %s116
      %s117 = sphi 0, %s114
      %s118 = sphi 0, %s117
      %s134 = sphi 0, %s118
      %s140 = sphi 0, %s142
      %s143 = sphi 0, %s140
      %s144 = sphi 0, %s143
      %s160 = sphi 0, %s144
      %s164 = sphi 0, %s164
      %s166 = sphi 0, %s164
      %s167 = sphi 0, %s166
      %s181 = sphi 0, %s167
      %s189 = sphi 0, %s191
      %s192 = sphi 0, %s189
      %s193 = sphi 0, %s192
      %s209 = sphi 0, %s193
    $region4: #{self_attention_pallas.3} parent=1 // loop_header_branch
      %17 = sbr.rel (%p15) target = $region8
    $region5: #{self_attention_pallas.3} parent=1 // loop_body
      %s19 = ssub.s32 %s14, 1
      %s20 = ssub.s32 %s14, 2
      %s33 = sadd.s32 1, %s24
      %p34 = scmp.ge.s32.totalorder %s33, 1
      %s35 = scalar_select %p34, 0, %s33
      %s36 = sadd.s32 1, %s23
      %s37 = scalar_select %p34, %s36, %s23
      %p38 = scmp.ge.s32.totalorder %s37, 4
      %s39 = scalar_select %p38, 0, %s37
      %s40 = sadd.s32 1, %s22
      %s41 = scalar_select %p38, %s40, %s22
      %p42 = scmp.ge.s32.totalorder %s41, 1
      %s43 = scalar_select %p42, 0, %s41
      %s44 = sadd.s32 1, %s21
      %s45 = scalar_select %p42, %s44, %s21
      %p46 = scmp.ge.s32.totalorder %s45, 2
      %s47 = scalar_select %p46, 0, %s45
      %s48 = ssub.s32 %s21, %s47
      %s49 = ssub.s32 %s23, %s39
      %s50 = sor.u32 %s48, %s49
      %s51 = ssub.s32 %s22, %s43
      %s52 = sor.u32 %s50, %s51
      %p53 = scmp.eq.s32.totalorder %s52, 0
      %s55 = sadd.s32 %s54, 1
      %s56 = scalar_select %p53, %s54, %s55
      %p59 = pneg %p53
      %p60 = scmp.eq.s32.totalorder %s14, 7
      %p61 = por %p59, %p60
      %p62 = scmp.ne.s32.totalorder %s54, %s57
      %p63 = scmp.eq.s32.totalorder %s14, 0
      %p64 = por %p62, %p63
      %p65 = scmp.ne.s32.totalorder %s54, %s57
      %p66 = scmp.eq.s32.totalorder %s19, 7
      %p67 = por %p65, %p66
      %p68 = scmp.ne.s32.totalorder %s57, %s58
      %p69 = scmp.eq.s32.totalorder %s19, 0
      %p70 = por %p68, %p69
      %p71 = scmp.ne.s32.totalorder %s57, %s58
      %p72 = scmp.eq.s32.totalorder %s20, 7
      %p73 = por %p71, %p72
      %p75 = scmp.ne.s32.totalorder %s58, %s74
      %p76 = scmp.eq.s32.totalorder %s20, 0
      %p77 = por %p75, %p76
      %s78 = ssub.s32 %s21, %s47
      %s79 = ssub.s32 %s23, %s39
      %s80 = sor.u32 %s78, %s79
      %s81 = ssub.s32 %s24, %s35
      %s82 = sor.u32 %s80, %s81
      %p83 = scmp.eq.s32.totalorder %s82, 0
      %s85 = sadd.s32 %s84, 1
      %s86 = scalar_select %p83, %s84, %s85
      %p89 = pneg %p83
      %p90 = scmp.eq.s32.totalorder %s14, 7
      %p91 = por %p89, %p90
      %p92 = scmp.ne.s32.totalorder %s84, %s87
      %p93 = scmp.eq.s32.totalorder %s14, 0
      %p94 = por %p92, %p93
      %p95 = scmp.ne.s32.totalorder %s84, %s87
      %p96 = scmp.eq.s32.totalorder %s19, 7
      %p97 = por %p95, %p96
      %p98 = scmp.ne.s32.totalorder %s87, %s88
      %p99 = scmp.eq.s32.totalorder %s19, 0
      %p100 = por %p98, %p99
      %p101 = scmp.ne.s32.totalorder %s87, %s88
      %p102 = scmp.eq.s32.totalorder %s20, 7
      %p103 = por %p101, %p102
      %p105 = scmp.ne.s32.totalorder %s88, %s104
      %p106 = scmp.eq.s32.totalorder %s20, 0
      %p107 = por %p105, %p106
      %s108 = ssub.s32 %s21, %s47
      %s109 = ssub.s32 %s23, %s39
      %s110 = sor.u32 %s108, %s109
      %s111 = ssub.s32 %s24, %s35
      %s112 = sor.u32 %s110, %s111
      %p113 = scmp.eq.s32.totalorder %s112, 0
      %s115 = sadd.s32 %s114, 1
      %s116 = scalar_select %p113, %s114, %s115
      %p119 = pneg %p113
      %p120 = scmp.eq.s32.totalorder %s14, 7
      %p121 = por %p119, %p120
      %p122 = scmp.ne.s32.totalorder %s114, %s117
      %p123 = scmp.eq.s32.totalorder %s14, 0
      %p124 = por %p122, %p123
      %p125 = scmp.ne.s32.totalorder %s114, %s117
      %p126 = scmp.eq.s32.totalorder %s19, 7
      %p127 = por %p125, %p126
      %p128 = scmp.ne.s32.totalorder %s117, %s118
      %p129 = scmp.eq.s32.totalorder %s19, 0
      %p130 = por %p128, %p129
      %p131 = scmp.ne.s32.totalorder %s117, %s118
      %p132 = scmp.eq.s32.totalorder %s20, 7
      %p133 = por %p131, %p132
      %p135 = scmp.ne.s32.totalorder %s118, %s134
      %p136 = scmp.eq.s32.totalorder %s20, 0
      %p137 = por %p135, %p136
      %s138 = ssub.s32 %s23, %s39
      %p139 = scmp.eq.s32.totalorder %s138, 0
      %s141 = sadd.s32 %s140, 1
      %s142 = scalar_select %p139, %s140, %s141
      %p145 = pneg %p139
      %p146 = scmp.eq.s32.totalorder %s14, 7
      %p147 = por %p145, %p146
      %p148 = scmp.ne.s32.totalorder %s140, %s143
      %p149 = scmp.eq.s32.totalorder %s14, 0
      %p150 = por %p148, %p149
      %p151 = scmp.ne.s32.totalorder %s140, %s143
      %p152 = scmp.eq.s32.totalorder %s19, 7
      %p153 = por %p151, %p152
      %p154 = scmp.ne.s32.totalorder %s143, %s144
      %p155 = scmp.eq.s32.totalorder %s19, 0
      %p156 = por %p154, %p155
      %p157 = scmp.ne.s32.totalorder %s143, %s144
      %p158 = scmp.eq.s32.totalorder %s20, 7
      %p159 = por %p157, %p158
      %p161 = scmp.ne.s32.totalorder %s144, %s160
      %p162 = scmp.eq.s32.totalorder %s20, 0
      %p163 = por %p161, %p162
      %s165 = sadd.s32 %s164, 1
      %p168 = scmp.eq.s32.totalorder %s14, 7
      %p169 = scmp.ne.s32.totalorder %s164, %s166
      %p170 = scmp.eq.s32.totalorder %s14, 0
      %p171 = por %p169, %p170
      %p172 = scmp.ne.s32.totalorder %s164, %s166
      %p173 = scmp.eq.s32.totalorder %s19, 7
      %p174 = por %p172, %p173
      %p175 = scmp.ne.s32.totalorder %s166, %s167
      %p176 = scmp.eq.s32.totalorder %s19, 0
      %p177 = por %p175, %p176
      %p178 = scmp.ne.s32.totalorder %s166, %s167
      %p179 = scmp.eq.s32.totalorder %s20, 7
      %p180 = por %p178, %p179
      %p182 = scmp.ne.s32.totalorder %s167, %s181
      %p183 = scmp.eq.s32.totalorder %s20, 0
      %p184 = por %p182, %p183
      %s185 = ssub.s32 %s21, %s47
      %s186 = ssub.s32 %s22, %s43
      %s187 = sor.u32 %s185, %s186
      %p188 = scmp.eq.s32.totalorder %s187, 0
      %s190 = sadd.s32 %s189, 1
      %s191 = scalar_select %p188, %s189, %s190
      %p194 = pneg %p188
      %p195 = scmp.eq.s32.totalorder %s14, 7
      %p196 = por %p194, %p195
      %p197 = scmp.ne.s32.totalorder %s189, %s192
      %p198 = scmp.eq.s32.totalorder %s14, 0
      %p199 = por %p197, %p198
      %p200 = scmp.ne.s32.totalorder %s189, %s192
      %p201 = scmp.eq.s32.totalorder %s19, 7
      %p202 = por %p200, %p201
      %p203 = scmp.ne.s32.totalorder %s192, %s193
      %p204 = scmp.eq.s32.totalorder %s19, 0
      %p205 = por %p203, %p204
      %p206 = scmp.ne.s32.totalorder %s192, %s193
      %p207 = scmp.eq.s32.totalorder %s20, 7
      %p208 = por %p206, %p207
      %p210 = scmp.ne.s32.totalorder %s193, %s209
      %p211 = scmp.eq.s32.totalorder %s20, 0
      %p212 = por %p210, %p211
      %p213 = scmp.le.s32.totalorder 1, %s14
      %p214 = scmp.lt.s32.totalorder %s14, 9
      %p215 = pnand %p213, %p214
      %p216 = pneg %p215
      // Predicated region
      $region9: #{self_attention_pallas.3} parent=5 // pred_check
        _
      $region10: #{self_attention_pallas.3} parent=5 // pred_check_branch
        %218 = sbr.rel (%p215) target = $region12
      $region11: #{self_attention_pallas.3} parent=5 // pred_region
        %s219 = ssub.s32 %s14, 1
        // Predicated region
        $region13: #{self_attention_pallas.3} parent=11 // pred_check
          %p220 = pneg %p177
        $region14: #{self_attention_pallas.3} parent=11 // pred_check_branch
          %222 = sbr.rel (%p220) target = $region16
        $region15: #{self_attention_pallas.3} parent=11 // pred_region
          _
        $region16: #{self_attention_pallas.3} parent=11 // pred_fallthru
          _
      $region12: #{self_attention_pallas.3} parent=5 // pred_fallthru
        _
      %p223 = scmp.lt.s32.totalorder %s14, 8
      // Predicated region
      $region17: #{self_attention_pallas.3} parent=5 // pred_check
        %p224 = pneg %p223
      $region18: #{self_attention_pallas.3} parent=5 // pred_check_branch
        %226 = sbr.rel (%p224) target = $region20
      $region19: #{self_attention_pallas.3} parent=5 // pred_region
        // Predicated region
        $region21: #{self_attention_pallas.3} parent=19 // pred_check
          %p227 = pneg %p64
        $region22: #{self_attention_pallas.3} parent=19 // pred_check_branch
          %229 = sbr.rel (%p227) target = $region24
        $region23: #{self_attention_pallas.3} parent=19 // pred_region
          %p230 = scmp.lt.s32.totalorder %s21, 1
          %s231 = scalar_select %p230, %s21, 1
          %p232 = scmp.lt.s32.totalorder %s23, 3
          %s233 = scalar_select %p232, %s23, 3
          %p234 = scmp.lt.s32.totalorder %s22, 0
          %s235 = scalar_select %p234, %s22, 0
          %s236 = sadd.s32 %s235, %s233
          %s237 = smul.addr %s231, 4
          %s238 = sadd.s32 %s236, %s237
          %s239 = smul.addr %s238, 4
          %s240 = scalar_lea.vmem %s0, %s239
        $region24: #{self_attention_pallas.3} parent=19 // pred_fallthru
          _
        // Predicated region
        $region25: #{self_attention_pallas.3} parent=19 // pred_check
          %p241 = pneg %p94
        $region26: #{self_attention_pallas.3} parent=19 // pred_check_branch
          %243 = sbr.rel (%p241) target = $region28
        $region27: #{self_attention_pallas.3} parent=19 // pred_region
          %p244 = scmp.lt.s32.totalorder %s21, 1
          %s245 = scalar_select %p244, %s21, 1
          %p246 = scmp.lt.s32.totalorder %s23, 3
          %s247 = scalar_select %p246, %s23, 3
          %p248 = scmp.lt.s32.totalorder %s24, 0
          %s249 = scalar_select %p248, %s24, 0
          %s250 = sadd.s32 %s249, %s247
          %s251 = smul.addr %s245, 4
          %s252 = sadd.s32 %s250, %s251
          %s253 = smul.addr %s252, 4
          %s254 = scalar_lea.vmem %s1, %s253
        $region28: #{self_attention_pallas.3} parent=19 // pred_fallthru
          _
        // Predicated region
        $region29: #{self_attention_pallas.3} parent=19 // pred_check
          %p255 = pneg %p124
        $region30: #{self_attention_pallas.3} parent=19 // pred_check_branch
          %257 = sbr.rel (%p255) target = $region32
        $region31: #{self_attention_pallas.3} parent=19 // pred_region
          %p258 = scmp.lt.s32.totalorder %s21, 1
          %s259 = scalar_select %p258, %s21, 1
          %p260 = scmp.lt.s32.totalorder %s23, 3
          %s261 = scalar_select %p260, %s23, 3
          %p262 = scmp.lt.s32.totalorder %s24, 0
          %s263 = scalar_select %p262, %s24, 0
          %s264 = sadd.s32 %s263, %s261
          %s265 = smul.addr %s259, 4
          %s266 = sadd.s32 %s264, %s265
          %s267 = smul.addr %s266, 4
          %s268 = scalar_lea.vmem %s2, %s267
        $region32: #{self_attention_pallas.3} parent=19 // pred_fallthru
          _
        // Predicated region
        $region33: #{self_attention_pallas.3} parent=19 // pred_check
          %p269 = pneg %p150
        $region34: #{self_attention_pallas.3} parent=19 // pred_check_branch
          %271 = sbr.rel (%p269) target = $region36
        $region35: #{self_attention_pallas.3} parent=19 // pred_region
          %p272 = scmp.lt.s32.totalorder %s23, 3
          %s273 = scalar_select %p272, %s23, 3
          %s274 = smul.addr %s273, 4
          %s275 = scalar_lea.vmem %s3, %s274
        $region36: #{self_attention_pallas.3} parent=19 // pred_fallthru
          _
      $region20: #{self_attention_pallas.3} parent=5 // pred_fallthru
        _
      %p276 = scmp.le.s32.totalorder 1, %s14
      %p277 = scmp.lt.s32.totalorder %s14, 9
      %p278 = pnand %p276, %p277
      %p279 = pneg %p278
      // Predicated region
      $region37: #{self_attention_pallas.3} parent=5 // pred_check
        _
      $region38: #{self_attention_pallas.3} parent=5 // pred_check_branch
        %281 = sbr.rel (%p278) target = $region40
      $region39: #{self_attention_pallas.3} parent=5 // pred_region
        %s282 = ssub.s32 %s14, 1
        %p283 = scmp.lt.s32.totalorder %s25, 1
        %s284 = scalar_select %p283, %s25, 1
        %p285 = scmp.lt.s32.totalorder %s27, 3
        %s286 = scalar_select %p285, %s27, 3
        %p287 = scmp.lt.s32.totalorder %s26, 0
        %s288 = scalar_select %p287, %s26, 0
        %s289 = sadd.s32 %s288, %s286
        %s290 = smul.addr %s284, 4
        %s291 = sadd.s32 %s289, %s290
        %s292 = smul.addr %s291, 4
        %s293 = scalar_lea.vmem %s0, %s292
        %p294 = pneg %p70
        %p295 = pneg %p67
        %p296 = scmp.lt.s32.totalorder %s25, 1
        %s297 = scalar_select %p296, %s25, 1
        %p298 = scmp.lt.s32.totalorder %s27, 3
        %s299 = scalar_select %p298, %s27, 3
        %p300 = scmp.lt.s32.totalorder %s28, 0
        %s301 = scalar_select %p300, %s28, 0
        %s302 = sadd.s32 %s301, %s299
        %s303 = smul.addr %s297, 4
        %s304 = sadd.s32 %s302, %s303
        %s305 = smul.addr %s304, 4
        %s306 = scalar_lea.vmem %s1, %s305
        %p307 = pneg %p100
        %p308 = pneg %p97
        %p309 = scmp.lt.s32.totalorder %s25, 1
        %s310 = scalar_select %p309, %s25, 1
        %p311 = scmp.lt.s32.totalorder %s27, 3
        %s312 = scalar_select %p311, %s27, 3
        %p313 = scmp.lt.s32.totalorder %s28, 0
        %s314 = scalar_select %p313, %s28, 0
        %s315 = sadd.s32 %s314, %s312
        %s316 = smul.addr %s310, 4
        %s317 = sadd.s32 %s315, %s316
        %s318 = smul.addr %s317, 4
        %s319 = scalar_lea.vmem %s2, %s318
        %p320 = pneg %p130
        %p321 = pneg %p127
        %p322 = scmp.lt.s32.totalorder %s27, 3
        %s323 = scalar_select %p322, %s27, 3
        %s324 = smul.addr %s323, 4
        %s325 = scalar_lea.vmem %s3, %s324
        %p326 = pneg %p156
        %p327 = pneg %p153
        %p328 = pneg %p177
        %p329 = pneg %p174
        %p330 = pneg %p205
        %p331 = pneg %p202
        %s332 = sand.u32 %s192, 1
        %s333 = scalar_lea.sflag [#allocation7], %s332
        %s334 = sand.u32 %s192, 1
        %s335 = smul.addr %s334, 8
        %s336 = scalar_lea.vmem [#allocation6], %s335
        %p337 = scmp.lt.s32.totalorder %s25, 1
        %s338 = scalar_select %p337, %s25, 1
        %p339 = scmp.lt.s32.totalorder %s27, 3
        %s340 = scalar_select %p339, %s27, 3
        %p341 = scmp.lt.s32.totalorder %s26, 0
        %s342 = scalar_select %p341, %s26, 0
        %s343 = sadd.s32 %s342, %s340
        %s344 = smul.addr %s338, 4
        %s345 = sadd.s32 %s343, %s344
        %s346 = smul.addr %s345, 4
        %s347 = scalar_lea.vmem %s0, %s346
        %p348 = scmp.lt.s32.totalorder %s25, 1
        %s349 = scalar_select %p348, %s25, 1
        %p350 = scmp.lt.s32.totalorder %s27, 3
        %s351 = scalar_select %p350, %s27, 3
        %p352 = scmp.lt.s32.totalorder %s28, 0
        %s353 = scalar_select %p352, %s28, 0
        %s354 = sadd.s32 %s353, %s351
        %s355 = smul.addr %s349, 4
        %s356 = sadd.s32 %s354, %s355
        %s357 = smul.addr %s356, 4
        %s358 = scalar_lea.vmem %s1, %s357
        %p359 = scmp.lt.s32.totalorder %s25, 1
        %s360 = scalar_select %p359, %s25, 1
        %p361 = scmp.lt.s32.totalorder %s27, 3
        %s362 = scalar_select %p361, %s27, 3
        %p363 = scmp.lt.s32.totalorder %s28, 0
        %s364 = scalar_select %p363, %s28, 0
        %s365 = sadd.s32 %s364, %s362
        %s366 = smul.addr %s360, 4
        %s367 = sadd.s32 %s365, %s366
        %s368 = smul.addr %s367, 4
        %s369 = scalar_lea.vmem %s2, %s368
        %p370 = scmp.lt.s32.totalorder %s27, 3
        %s371 = scalar_select %p370, %s27, 3
        %s372 = smul.addr %s371, 4
        %s373 = scalar_lea.vmem %s3, %s372
        %p375 = scmp.eq.s32.totalorder %s27, 0
        %p376 = scmp.eq.s32.totalorder %s28, 0
        %p377 = pnand %p375, %p376
        %p378 = pneg %p377
        // Predicated region
        $region41: #{self_attention_pallas.3} parent=39 // pred_check
          _
        $region42: #{self_attention_pallas.3} parent=39 // pred_check_branch
          %380 = sbr.rel (%p377) target = $region44
        $region43: #{self_attention_pallas.3} parent=39 // pred_region
          %vm381 = vcmask 261120
          %382 = vst.msk [vmem:[#allocation2] sm:$0xff] %vm381, 0.0
        $region44: #{self_attention_pallas.3} parent=39 // pred_fallthru
          _
        // Predicated region
        $region45: #{self_attention_pallas.3} parent=39 // pred_check
          %p383 = pneg %p376
        $region46: #{self_attention_pallas.3} parent=39 // pred_check_branch
          %385 = sbr.rel (%p383) target = $region48
        $region47: #{self_attention_pallas.3} parent=39 // pred_region
          %vm386 = vcmask 7168
          %387 = vst.msk [vmem:[#allocation3] sm:$0xff] %vm386, -inf
          %388 = vst.msk [vmem:[#allocation4] sm:$0xff] %vm386, 0.0
          %vm389 = vcmask 64512
          %390 = vst.msk [vmem:[#allocation5] sm:$0xff] %vm389, 0.0
        $region48: #{self_attention_pallas.3} parent=39 // pred_fallthru
          _
        %v391 = vld [vmem:[%s347] sm:$0xf]
        %v392 = vld [vmem:[%s358] sm:$0xf]
        %vm393 = vcmask 64512
        %v395 = vsel %vm393, %v391, 0
        %v398 = vsel %vm393, %v392, 0
        %400 = vmatprep.subr.bf16.mxu0 0
        %401 = vmatpush1.bf16.xpose.msra.mxu0 %v398
        %402 = vmatprep.subr.bf16.mxu0 0
        %403 = vmatpush1.bf16.xpose.msra.mxu0 0
        %404 = vmatprep.subr.bf16.mxu0 0
        %405 = vmatpush1.bf16.xpose.msra.mxu0 0
        %406 = vmatprep.subr.bf16.mxu0 0
        %407 = vmatpush1.bf16.xpose.msra.mxu0 0
        %408 = vmatprep.subr.bf16.mxu0 0
        %409 = vmatpush1.bf16.xpose.msra.mxu0 0
        %410 = vmatprep.subr.bf16.mxu0 0
        %411 = vmatpush1.bf16.xpose.msra.mxu0 0
        %412 = vmatprep.subr.bf16.mxu0 0
        %413 = vmatpush1.bf16.xpose.msra.mxu0 0
        %414 = vmatprep.subr.bf16.mxu0 0
        %415 = vmatpush1.bf16.xpose.msra.mxu0 0
        %416 = vmatprep.subr.bf16.mxu0 0
        %417 = vmatpush1.bf16.xpose.msra.mxu0 0
        %418 = vmatprep.subr.bf16.mxu0 0
        %419 = vmatpush1.bf16.xpose.msra.mxu0 0
        %420 = vmatprep.subr.bf16.mxu0 0
        %421 = vmatpush1.bf16.xpose.msra.mxu0 0
        %422 = vmatprep.subr.bf16.mxu0 0
        %423 = vmatpush1.bf16.xpose.msra.mxu0 0
        %424 = vmatprep.subr.bf16.mxu0 0
        %425 = vmatpush1.bf16.xpose.msra.mxu0 0
        %426 = vmatprep.subr.bf16.mxu0 0
        %427 = vmatpush1.bf16.xpose.msra.mxu0 0
        %428 = vmatprep.subr.bf16.mxu0 0
        %429 = vmatpush1.bf16.xpose.msra.mxu0 0
        %430 = vmatprep.subr.bf16.mxu0 0
        %431 = vmatpush1.bf16.xpose.msra.mxu0 0
        %432 = vmatprep.mubr.bf16.mxu0 0
        %433 = vmatmul.mubr.bf16.gmra.mrb[0].mxu0 %v395
        %v434 = vpop.f32.mrb[0].mxu0
        %v435 = vadd.f32 0.0, %v434
        %v436 = vpop.f32.mrb[0].mxu0
        %v437 = vpop.f32.mrb[0].mxu0
        %v438 = vpop.f32.mrb[0].mxu0
        %439 = vdwg.mxu0
        %v440 = vld [vmem:[#allocation3] sm:$0xff]
        %v441 = vsel %vm393, %v435, -inf
        %442 = vmax.xlane.f32.xlu0 %v441
        %v443 = vpop.xlane.xlu0 %442
        %v444 = vmax.f32 %v440, %v443
        %v445 = vsub.f32 %v440, %v444
        %v446 = vmul.f32 %v445, 1.442695
        %v447 = vpow.pop %v446
        %449 = vset.pattern.permute.xlu0 0
        %450 = vperm.xlu0 %449, %v444
        %v451 = vpop.permute.xlu0 %450
        %v453 = vsub.f32 %v435, %v451
        %v454 = vmul.f32 %v453, 1.442695
        %v455 = vpow.pop %v454
        %v456 = vld [vmem:[#allocation4] sm:$0xff]
        %v457 = vmul.f32 %v447, %v456
        %v458 = vsel %vm393, %v455, 0.0
        %459 = vadd.xlane.f32.xlu0 %v458
        %v460 = vpop.xlane.xlu0 %459
        %v461 = vadd.f32 %v457, %v460
        %vm462 = vcmask 7168
        %463 = vst.msk [vmem:[#allocation4] sm:$0xff] %vm462, %v461
        %v464 = vld [vmem:[#allocation5] sm:$0xff]
        %466 = vset.pattern.permute.xlu0 0
        %467 = vperm.xlu0 %466, %v447
        %v468 = vpop.permute.xlu0 %467
        %v470 = vmul.f32 %v468, %v464
        %v471 = vpack.c.bf16 %v455, %v455
        %v472 = vld [vmem:[%s369] sm:$0xf]
        %v474 = vsel %vm393, %v471, 0
        %vm476 = vcmask 1043456
        %v478 = vsel %vm476, %v472, 0
        %480 = vmatprep.subr.bf16.mxu0 0
        %481 = vmatpush1.bf16.msra.mxu0 %v478
        %482 = vmatprep.subr.bf16.mxu0 0
        %483 = vmatpush1.bf16.msra.mxu0 0
        %484 = vmatprep.subr.bf16.mxu0 0
        %485 = vmatpush1.bf16.msra.mxu0 0
        %486 = vmatprep.subr.bf16.mxu0 0
        %487 = vmatpush1.bf16.msra.mxu0 0
        %488 = vmatprep.subr.bf16.mxu0 0
        %489 = vmatpush1.bf16.msra.mxu0 0
        %490 = vmatprep.subr.bf16.mxu0 0
        %491 = vmatpush1.bf16.msra.mxu0 0
        %492 = vmatprep.subr.bf16.mxu0 0
        %493 = vmatpush1.bf16.msra.mxu0 0
        %494 = vmatprep.subr.bf16.mxu0 0
        %495 = vmatpush1.bf16.msra.mxu0 0
        %496 = vmatprep.subr.bf16.mxu0 0
        %497 = vmatpush1.bf16.msra.mxu0 0
        %498 = vmatprep.subr.bf16.mxu0 0
        %499 = vmatpush1.bf16.msra.mxu0 0
        %500 = vmatprep.subr.bf16.mxu0 0
        %501 = vmatpush1.bf16.msra.mxu0 0
        %502 = vmatprep.subr.bf16.mxu0 0
        %503 = vmatpush1.bf16.msra.mxu0 0
        %504 = vmatprep.subr.bf16.mxu0 0
        %505 = vmatpush1.bf16.msra.mxu0 0
        %506 = vmatprep.subr.bf16.mxu0 0
        %507 = vmatpush1.bf16.msra.mxu0 0
        %508 = vmatprep.subr.bf16.mxu0 0
        %509 = vmatpush1.bf16.msra.mxu0 0
        %510 = vmatprep.subr.bf16.mxu0 0
        %511 = vmatpush1.bf16.msra.mxu0 0
        %512 = vmatprep.mubr.bf16.mxu0 0
        %513 = vmatmul.mubr.bf16.gmra.mrb[0].mxu0 %v474
        %v514 = vpop.f32.mrb[0].mxu0
        %v515 = vadd.f32 0.0, %v514
        %v516 = vpop.f32.mrb[0].mxu0
        %v517 = vpop.f32.mrb[0].mxu0
        %v518 = vpop.f32.mrb[0].mxu0
        %519 = vdwg.mxu0
        %v520 = vadd.f32 %v470, %v515
        %521 = vst.msk [vmem:[#allocation5] sm:$0xff] %vm393, %v520
        %522 = vst.msk [vmem:[#allocation3] sm:$0xff] %vm462, %v444
        // Predicated region
        $region49: #{self_attention_pallas.3} parent=39 // pred_check
          %p523 = pneg %p376
        $region50: #{self_attention_pallas.3} parent=39 // pred_check_branch
          %525 = sbr.rel (%p523) target = $region52
        $region51: #{self_attention_pallas.3} parent=39 // pred_region
          %v526 = vld [vmem:[#allocation5] sm:$0xff]
          %v527 = vld [vmem:[#allocation4] sm:$0xff]
          %v528 = vrcp.pop %v527
          %530 = vset.pattern.permute.xlu0 0
          %531 = vperm.xlu0 %530, %v528
          %v532 = vpop.permute.xlu0 %531
          %v534 = vmul.f32 %v526, %v532
          %v535 = vld [vmem:[#allocation2] sm:$0xff]
          %v536 = vpack.c.bf16 %v534, %v534
          %v537 = vld [vmem:[%s373] sm:$0xf]
          %v539 = vsel %vm393, %v536, 0
          %v542 = vsel %vm476, %v537, 0
          %544 = vmatprep.subr.bf16.mxu0 0
          %545 = vmatpush1.bf16.msra.mxu0 %v542
          %546 = vmatprep.subr.bf16.mxu0 0
          %547 = vmatpush1.bf16.msra.mxu0 0
          %548 = vmatprep.subr.bf16.mxu0 0
          %549 = vmatpush1.bf16.msra.mxu0 0
          %550 = vmatprep.subr.bf16.mxu0 0
          %551 = vmatpush1.bf16.msra.mxu0 0
          %552 = vmatprep.subr.bf16.mxu0 0
          %553 = vmatpush1.bf16.msra.mxu0 0
          %554 = vmatprep.subr.bf16.mxu0 0
          %555 = vmatpush1.bf16.msra.mxu0 0
          %556 = vmatprep.subr.bf16.mxu0 0
          %557 = vmatpush1.bf16.msra.mxu0 0
          %558 = vmatprep.subr.bf16.mxu0 0
          %559 = vmatpush1.bf16.msra.mxu0 0
          %560 = vmatprep.subr.bf16.mxu0 0
          %561 = vmatpush1.bf16.msra.mxu0 0
          %562 = vmatprep.subr.bf16.mxu0 0
          %563 = vmatpush1.bf16.msra.mxu0 0
          %564 = vmatprep.subr.bf16.mxu0 0
          %565 = vmatpush1.bf16.msra.mxu0 0
          %566 = vmatprep.subr.bf16.mxu0 0
          %567 = vmatpush1.bf16.msra.mxu0 0
          %568 = vmatprep.subr.bf16.mxu0 0
          %569 = vmatpush1.bf16.msra.mxu0 0
          %570 = vmatprep.subr.bf16.mxu0 0
          %571 = vmatpush1.bf16.msra.mxu0 0
          %572 = vmatprep.subr.bf16.mxu0 0
          %573 = vmatpush1.bf16.msra.mxu0 0
          %574 = vmatprep.subr.bf16.mxu0 0
          %575 = vmatpush1.bf16.msra.mxu0 0
          %576 = vmatprep.mubr.bf16.mxu0 0
          %577 = vmatmul.mubr.bf16.gmra.mrb[0].mxu0 %v539
          %v578 = vpop.f32.mrb[0].mxu0
          %v579 = vadd.f32 0.0, %v578
          %v580 = vpop.f32.mrb[0].mxu0
          %v581 = vpop.f32.mrb[0].mxu0
          %v582 = vpop.f32.mrb[0].mxu0
          %583 = vdwg.mxu0
          %v584 = vadd.f32 %v535, %v579
          %vm585 = vcmask 261120
          %586 = vst.msk [vmem:[#allocation2] sm:$0xff] %vm585, %v584
        $region52: #{self_attention_pallas.3} parent=39 // pred_fallthru
          _
        %p587 = scmp.eq.s32.totalorder %s27, 3
        %p588 = pnand %p587, %p376
        %p589 = pneg %p588
        // Predicated region
        $region53: #{self_attention_pallas.3} parent=39 // pred_check
          _
        $region54: #{self_attention_pallas.3} parent=39 // pred_check_branch
          %591 = sbr.rel (%p588) target = $region56
        $region55: #{self_attention_pallas.3} parent=39 // pred_region
          %v592 = vld [vmem:[#allocation2] sm:$0xff]
          %v593 = vld [vmem:[%s4] sm:$0x1]
          %v595 = vlaneseq
          %v596 = vshrl.u32 %v595, 7
          %v597 = vsub.s32 0, %v596
          %v598 = vrot.slane %v593, %v597
          %v600 = vadd.f32 %v592, %v598
          %vm601 = vcmask 261120
          %602 = vst.msk [vmem:[%s336] sm:$0xff] %vm601, %v600
        $region56: #{self_attention_pallas.3} parent=39 // pred_fallthru
          _
        %s603 = sand.u32 %s192, 1
        %s604 = scalar_lea.sflag [#allocation7], %s603
        %s605 = sand.u32 %s192, 1
        %s606 = smul.addr %s605, 8
        %s607 = scalar_lea.vmem [#allocation6], %s606
        // Predicated region
        $region57: #{self_attention_pallas.3} parent=39 // pred_check
          %p608 = pneg %p202
        $region58: #{self_attention_pallas.3} parent=39 // pred_check_branch
          %610 = sbr.rel (%p608) target = $region60
        $region59: #{self_attention_pallas.3} parent=39 // pred_region
          %s612 = ssub.s32 128, 128
          %613 = vsyncadd %s604, %s612
          %s614 = sadd.s32 %s26, %s25
          %s615 = smul.addr %s614, 128
          %s616 = scalar_lea.hbm %s5, %s615
          %s618 = sshll.u32 %s607, 4
          %s619 = int_to_ptr.vmem [resolvable:$true] %s618
          %621 = dma.vmem_to_hbm [thread:$0]  %s619, 128, %s616, %s604
        $region60: #{self_attention_pallas.3} parent=39 // pred_fallthru
          _
      $region40: #{self_attention_pallas.3} parent=5 // pred_fallthru
        _
      %p622 = scmp.le.s32.totalorder 2, %s14
      // Predicated region
      $region61: #{self_attention_pallas.3} parent=5 // pred_check
        %p623 = pneg %p622
      $region62: #{self_attention_pallas.3} parent=5 // pred_check_branch
        %625 = sbr.rel (%p623) target = $region64
      $region63: #{self_attention_pallas.3} parent=5 // pred_region
        %s626 = ssub.s32 %s14, 2
        // Predicated region
        $region65: #{self_attention_pallas.3} parent=63 // pred_check
          %p627 = pneg %p208
        $region66: #{self_attention_pallas.3} parent=63 // pred_check_branch
          %629 = sbr.rel (%p627) target = $region68
        $region67: #{self_attention_pallas.3} parent=63 // pred_region
          %s630 = sand.u32 %s193, 1
          %s631 = scalar_lea.sflag [#allocation7], %s630
          %s632 = sand.u32 %s193, 1
          %s633 = smul.addr %s632, 8
          %s634 = scalar_lea.vmem [#allocation6], %s633
          %635 = dma.done %s631, 128
        $region68: #{self_attention_pallas.3} parent=63 // pred_fallthru
          _
      $region64: #{self_attention_pallas.3} parent=5 // pred_fallthru
        _
    $region6: #{self_attention_pallas.3} parent=1 // loop_footer
      %s18 = sadd.s32 1, %s14
    $region7: #{self_attention_pallas.3} parent=1 // loop_footer_branch
      %13 = sbr.rel target = $region3
    $region8: #{self_attention_pallas.3} parent=1 // loop_exit
      _
    %636 = vsyncpa [#allocation7], 1
    %s637 = scalar_lea.sflag [#allocation7], 1
    %638 = vsyncpa %s637, 1

</llo_original>
